<compile_context>
chip_gen: v6e
topology: v6e:2x2x1
jax: 0.10.0
libtpu: 0.0.40
codegen_flags: <defaults>
</compile_context>

<pallas_src>
import jax
import jax.numpy as jnp
from jax.experimental import pallas as pl
from jax.experimental.pallas import tpu as pltpu

INPUT_DIM = 512
HIDDEN_DIM = 256
NUM_CLASSES = 4
LANE = 128   # padded logits width (lane-dense, unmasked stores)
SUB = 16     # bf16 sublane tile (output tile is bf16)


def mlp_kernel(x_ref, w1_ref, b1_ref, w2_ref, b2_ref, out_ref):
    # x tile arrives f32 from HBM; cast to bf16 on the VPU right before the MXU.
    x_bf = x_ref[...].astype(jnp.bfloat16)
    # fc1: (TB, 512) bf16 @ (512, 256) bf16 -> f32 accumulate (MXU)
    h = jnp.dot(x_bf, w1_ref[...], preferred_element_type=jnp.float32)
    h = jnp.maximum(h + b1_ref[...], 0.0)                      # bias + ReLU (VPU)
    # fc2: (TB, 256) bf16 @ (256, 128) bf16 -> f32 accumulate (MXU)
    # (w2/b2 are zero-padded 4 -> 128 columns; the extra columns stay 0.)
    o = jnp.dot(h.astype(jnp.bfloat16), w2_ref[...],
                preferred_element_type=jnp.float32)
    o = o + b2_ref[...]
    out_ref[...] = o.astype(out_ref.dtype)                     # bf16 lane-dense store


def _cdiv(a, b):
    return -(-a // b)


def _round_up(n, m):
    return ((n + m - 1) // m) * m


def prepare_params(w1, b1, w2, b2):
    """One-time weight prep (hoisted out of the per-call path)."""
    w1_bf = jnp.asarray(w1, jnp.bfloat16)
    b1_f = jnp.asarray(b1, jnp.float32).reshape(1, HIDDEN_DIM)
    w2_pad = jnp.zeros((HIDDEN_DIM, LANE), jnp.bfloat16)
    w2_pad = w2_pad.at[:, :NUM_CLASSES].set(
        jnp.asarray(w2, jnp.bfloat16).reshape(HIDDEN_DIM, NUM_CLASSES))
    b2_pad = jnp.zeros((1, LANE), jnp.float32)
    b2_pad = b2_pad.at[:, :NUM_CLASSES].set(
        jnp.asarray(b2, jnp.float32).reshape(1, NUM_CLASSES))
    return w1_bf, b1_f, w2_pad, b2_pad


def mlp_forward(x, params, *, tb_max=1024):
    """x: (B, INPUT_DIM) f32.  Returns (B, NUM_CLASSES) f32 logits."""
    w1_bf, b1_f, w2_pad, b2_pad = params
    B = x.shape[0]

    # Pad the batch only to the 16-row sublane tile (<= 15 rows), never to TB.
    B_pad = _round_up(max(B, SUB), SUB)
    if B_pad != B:
        x = jnp.pad(x, ((0, B_pad - B), (0, 0)))

    # Adaptive batch tile:
    #  * capped at tb_max (amortizes per-step overhead; ~5 MiB VMEM at 1024),
    #  * >=2 grid steps whenever the batch allows, so the "parallel" axis can
    #    shard across both TensorCores on v7x,
    #  * multiple of 16 so the bf16 output tile stays sublane-aligned.
    n_tiles = max(1, _cdiv(B_pad, tb_max))
    if n_tiles == 1 and B_pad >= 2 * SUB:
        n_tiles = 2
    TB = _round_up(_cdiv(B_pad, n_tiles), SUB)
    grid = (_cdiv(B_pad, TB),)   # last block may be partial (16-row aligned)

    out = pl.pallas_call(
        mlp_kernel,
        out_shape=jax.ShapeDtypeStruct((B_pad, LANE), jnp.bfloat16),
        grid_spec=pltpu.PrefetchScalarGridSpec(
            num_scalar_prefetch=0,
            grid=grid,
            in_specs=[
                # x tile marches over the batch (f32; cast in-kernel).
                pl.BlockSpec((TB, INPUT_DIM), lambda i: (i, 0)),
                # Weights / biases: constant index_map -> VMEM-resident.
                pl.BlockSpec((INPUT_DIM, HIDDEN_DIM), lambda i: (0, 0)),
                pl.BlockSpec((1, HIDDEN_DIM), lambda i: (0, 0)),
                pl.BlockSpec((HIDDEN_DIM, LANE), lambda i: (0, 0)),
                pl.BlockSpec((1, LANE), lambda i: (0, 0)),
            ],
            out_specs=pl.BlockSpec((TB, LANE), lambda i: (i, 0)),
        ),
        compiler_params=pltpu.CompilerParams(
            dimension_semantics=("parallel",),
        ),
    )(x, w1_bf, b1_f, w2_pad, b2_pad)

    # Drop batch padding + lane padding; logits back to f32.
    return out[:B, :NUM_CLASSES].astype(jnp.float32)


def init_params(key):
    """Deterministic init matching nn.Linear defaults (uniform +-1/sqrt(fan_in))."""
    k1, k2, k3, k4 = jax.random.split(key, 4)
    bound1 = 1.0 / jnp.sqrt(INPUT_DIM)
    bound2 = 1.0 / jnp.sqrt(HIDDEN_DIM)
    # Stored as (in, out): transpose of PyTorch's (out, in) weight layout.
    w1 = jax.random.uniform(k1, (INPUT_DIM, HIDDEN_DIM), jnp.float32, -bound1, bound1)
    b1 = jax.random.uniform(k2, (HIDDEN_DIM,), jnp.float32, -bound1, bound1)
    w2 = jax.random.uniform(k3, (HIDDEN_DIM, NUM_CLASSES), jnp.float32, -bound2, bound2)
    b2 = jax.random.uniform(k4, (NUM_CLASSES,), jnp.float32, -bound2, bound2)
    return w1, b1, w2, b2


if __name__ == "__main__":
    key = jax.random.PRNGKey(0)
    kx, kp = jax.random.split(key)
    w1, b1, w2, b2 = init_params(kp)
    params = prepare_params(w1, b1, w2, b2)   # one-time weight prep
    fwd = jax.jit(mlp_forward)

    def ref_bf16(x):
        # Mirrors the kernel's bf16-input / f32-accumulate / bf16-output math.
        h = jnp.dot(x.astype(jnp.bfloat16), w1.astype(jnp.bfloat16),
                    preferred_element_type=jnp.float32) + b1
        h = jnp.maximum(h, 0.0)
        o = jnp.dot(h.astype(jnp.bfloat16), w2.astype(jnp.bfloat16),
                    preferred_element_type=jnp.float32) + b2
        return o.astype(jnp.bfloat16).astype(jnp.float32)

    for batch in (8, 20):   # 20 exercises batch padding and a 2-step grid
        x = jax.random.normal(jax.random.fold_in(kx, batch),
                              (batch, INPUT_DIM), jnp.float32)
        out = jax.block_until_ready(fwd(x, params))
        assert out.shape == (batch, NUM_CLASSES)

        ref = ref_bf16(x)
        assert jnp.allclose(out, ref, atol=1e-2, rtol=1e-2), (
            f"batch={batch}: bf16-mirror max err "
            f"{float(jnp.max(jnp.abs(out - ref)))}")

        # Looser check vs the pure-f32 PyTorch-equivalent forward
        # (bf16 inputs / bf16 output are an intentional precision tradeoff).
        ref32 = jnp.maximum(x @ w1 + b1, 0.0) @ w2 + b2
        assert jnp.allclose(out, ref32, atol=6e-2, rtol=6e-2), (
            f"batch={batch}: f32-ref max err "
            f"{float(jnp.max(jnp.abs(out - ref32)))}")

    print("KERNEL_OK")
</pallas_src>

<mosaic_0001>
module attributes {stable_mosaic.version = 11 : i64} {
  func.func @mlp_kernel(%arg0: i32, %arg1: memref<16x512xf32, #tpu.memory_space<vmem>>, %arg2: memref<512x256xbf16, #tpu.memory_space<vmem>>, %arg3: memref<1x256xf32, #tpu.memory_space<vmem>>, %arg4: memref<256x128xbf16, #tpu.memory_space<vmem>>, %arg5: memref<1x128xf32, #tpu.memory_space<vmem>>, %arg6: memref<16x128xbf16, #tpu.memory_space<vmem>>) attributes {dimension_semantics = [#tpu.dimension_semantics<parallel>], iteration_bounds = array<i64: 1>, scalar_prefetch = 0 : i64, scratch_operands = 0 : i64, tpu.core_type = #tpu.core_type<tc>, window_params = [{transform_indices = @transform_0, window_bounds = array<i64: 16, 512>}, {pipeline_mode = #tpu.pipeline_mode<synchronous>, transform_indices = @transform_1, window_bounds = array<i64: 512, 256>}, {pipeline_mode = #tpu.pipeline_mode<synchronous>, transform_indices = @transform_2, window_bounds = array<i64: 1, 256>}, {pipeline_mode = #tpu.pipeline_mode<synchronous>, transform_indices = @transform_3, window_bounds = array<i64: 256, 128>}, {pipeline_mode = #tpu.pipeline_mode<synchronous>, transform_indices = @transform_4, window_bounds = array<i64: 1, 128>}, {transform_indices = @transform_5, window_bounds = array<i64: 16, 128>}]} {
    %c0 = arith.constant 0 : index
    %c0_0 = arith.constant 0 : index
    %0 = vector.load %arg1[%c0, %c0_0] : memref<16x512xf32, #tpu.memory_space<vmem>>, vector<16x512xf32>
    %1 = arith.truncf %0 : vector<16x512xf32> to vector<16x512xbf16>
    %c0_1 = arith.constant 0 : index
    %c0_2 = arith.constant 0 : index
    %2 = vector.load %arg2[%c0_1, %c0_2] : memref<512x256xbf16, #tpu.memory_space<vmem>>, vector<512x256xbf16>
    %cst = arith.constant dense<0.000000e+00> : vector<16x256xf32>
    %3 = tpu.matmul %1, %2, %cst {dimension_numbers = #tpu.dot_dimension_numbers<[1], [0], [0], [1], [0, 0, 1, 1], [], []>} : vector<16x512xbf16>, vector<512x256xbf16>, vector<16x256xf32> -> vector<16x256xf32>
    %c0_3 = arith.constant 0 : index
    %c0_4 = arith.constant 0 : index
    %4 = vector.load %arg3[%c0_3, %c0_4] : memref<1x256xf32, #tpu.memory_space<vmem>>, vector<1x256xf32>
    %5 = vector.broadcast %4 : vector<1x256xf32> to vector<16x256xf32>
    %6 = arith.addf %3, %5 : vector<16x256xf32>
    %cst_5 = arith.constant 0.000000e+00 : f32
    %7 = vector.broadcast %cst_5 : f32 to vector<16x256xf32>
    %8 = arith.maximumf %6, %7 : vector<16x256xf32>
    %9 = arith.truncf %8 : vector<16x256xf32> to vector<16x256xbf16>
    %c0_6 = arith.constant 0 : index
    %c0_7 = arith.constant 0 : index
    %10 = vector.load %arg4[%c0_6, %c0_7] : memref<256x128xbf16, #tpu.memory_space<vmem>>, vector<256x128xbf16>
    %cst_8 = arith.constant dense<0.000000e+00> : vector<16x128xf32>
    %11 = tpu.matmul %9, %10, %cst_8 {dimension_numbers = #tpu.dot_dimension_numbers<[1], [0], [0], [1], [0, 0, 1, 1], [], []>} : vector<16x256xbf16>, vector<256x128xbf16>, vector<16x128xf32> -> vector<16x128xf32>
    %c0_9 = arith.constant 0 : index
    %c0_10 = arith.constant 0 : index
    %12 = vector.load %arg5[%c0_9, %c0_10] : memref<1x128xf32, #tpu.memory_space<vmem>>, vector<1x128xf32>
    %13 = vector.broadcast %12 : vector<1x128xf32> to vector<16x128xf32>
    %14 = arith.addf %11, %13 : vector<16x128xf32>
    %15 = arith.truncf %14 : vector<16x128xf32> to vector<16x128xbf16>
    %c0_11 = arith.constant 0 : index
    %c0_12 = arith.constant 0 : index
    %16 = vector.load %arg6[%c0_11, %c0_12] : memref<16x128xbf16, #tpu.memory_space<vmem>>, vector<16x128xbf16>
    tpu.vector_store %arg6[%c0_11, %c0_12], %15 {strides = array<i32>} : memref<16x128xbf16, #tpu.memory_space<vmem>>, vector<16x128xbf16>,
    return
  }
  func.func @transform_0(%arg0: i32) -> (i32, i32) {
    %c0_i32 = arith.constant 0 : i32
    %c0_i32_0 = arith.constant 0 : i32
    return %arg0, %c0_i32 : i32, i32
  }
  func.func @transform_1(%arg0: i32) -> (i32, i32) {
    %c0_i32 = arith.constant 0 : i32
    %c0_i32_0 = arith.constant 0 : i32
    %c0_i32_1 = arith.constant 0 : i32
    return %c0_i32, %c0_i32_0 : i32, i32
  }
  func.func @transform_2(%arg0: i32) -> (i32, i32) {
    %c0_i32 = arith.constant 0 : i32
    %c0_i32_0 = arith.constant 0 : i32
    %c0_i32_1 = arith.constant 0 : i32
    return %c0_i32, %c0_i32_0 : i32, i32
  }
  func.func @transform_3(%arg0: i32) -> (i32, i32) {
    %c0_i32 = arith.constant 0 : i32
    %c0_i32_0 = arith.constant 0 : i32
    %c0_i32_1 = arith.constant 0 : i32
    return %c0_i32, %c0_i32_0 : i32, i32
  }
  func.func @transform_4(%arg0: i32) -> (i32, i32) {
    %c0_i32 = arith.constant 0 : i32
    %c0_i32_0 = arith.constant 0 : i32
    %c0_i32_1 = arith.constant 0 : i32
    return %c0_i32, %c0_i32_0 : i32, i32
  }
  func.func @transform_5(%arg0: i32) -> (i32, i32) {
    %c0_i32 = arith.constant 0 : i32
    %c0_i32_0 = arith.constant 0 : i32
    return %arg0, %c0_i32 : i32, i32
  }
}

</mosaic_0001>

<llo_original>
// kernel: mlp_forward.1
$region0: #{mlp_forward.1}
  #allocation0 [shape = 'u32[]', space=smem, size = 0x4, offset = 0x4, fixed_abs, tag = 'smem constant byte address 0x4 - core index']
  #allocation1 [shape = 'u32[144,128]{1,0:T(1,128)}', space=vmem, size = 0x12000, scoped, tag = 'internal scratch']
  %s0 = inlined_call_operand.vmem [shape: f32[16,512], index: 0, kind: input, shape index: {}]
  %s1 = inlined_call_operand.hbm [shape: bf16[512,256], index: 1, kind: input, shape index: {}]
  %s2 = inlined_call_operand.vmem [shape: f32[1,256], index: 2, kind: input, shape index: {}]
  %s3 = inlined_call_operand.hbm [shape: bf16[256,128], index: 3, kind: input, shape index: {}]
  %s4 = inlined_call_operand.vmem [shape: f32[1,128], index: 4, kind: input, shape index: {}]
  %s5 = inlined_call_operand.vmem [shape: bf16[16,128], index: 5, kind: output, shape index: {}]
  %s6 = sld [smem:[#allocation0]]
  $region38: #{mlp_forward.1} parent=0
    _
  %s8 = ssub.s32 1, %s6
  %s9 = scalar_select 0, %s8, %s6
  $region1: #{mlp_forward.1} parent=0
    #allocation2 [shape = 'u8[262144]{0}', space=vmem, size = 0x40000, scoped, tag = 'input window, operand 1, single buffered']
    #allocation3 [shape = 's32[1]{0}', space=sflag, size = 0x4, scoped, tag = 'scoped memory for mlp_forward.1']
    #allocation4 [shape = 'u8[65536]{0}', space=vmem, size = 0x10000, scoped, tag = 'input window, operand 3, single buffered']
    #allocation5 [shape = 's32[1]{0}', space=sflag, size = 0x4, scoped, tag = 'scoped memory for mlp_forward.1']
    %10 = vsyncpa [#allocation3], 0
    %11 = vsyncpa [#allocation5], 0
    // Predicated region
    $region2: #{mlp_forward.1} parent=1 // pred_check
      _
    $region3: #{mlp_forward.1} parent=1 // pred_check_branch
      %13 = sbr.rel (0) target = $region5
    $region4: #{mlp_forward.1} parent=1 // pred_region
      _
    $region5: #{mlp_forward.1} parent=1 // pred_fallthru
      _
    // Predicated region
    $region6: #{mlp_forward.1} parent=1 // pred_check
      _
    $region7: #{mlp_forward.1} parent=1 // pred_check_branch
      %15 = sbr.rel (0) target = $region9
    $region8: #{mlp_forward.1} parent=1 // pred_region
      %s17 = ssub.s32 8192, 8192
      %18 = vsyncadd [#allocation3], %s17
      %s19 = sshll.u32 [#allocation2], 4
      %s20 = int_to_ptr.vmem [resolvable:$true] %s19
      %25 = dma.hbm_to_vmem [thread:$0]  %s1, 8192, %s20, [#allocation3], 128, 128, 8
    $region9: #{mlp_forward.1} parent=1 // pred_fallthru
      _
    // Predicated region
    $region10: #{mlp_forward.1} parent=1 // pred_check
      _
    $region11: #{mlp_forward.1} parent=1 // pred_check_branch
      %27 = sbr.rel (0) target = $region13
    $region12: #{mlp_forward.1} parent=1 // pred_region
      _
    $region13: #{mlp_forward.1} parent=1 // pred_fallthru
      _
    // Predicated region
    $region14: #{mlp_forward.1} parent=1 // pred_check
      _
    $region15: #{mlp_forward.1} parent=1 // pred_check_branch
      %29 = sbr.rel (0) target = $region17
    $region16: #{mlp_forward.1} parent=1 // pred_region
      %s31 = ssub.s32 2048, 2048
      %32 = vsyncadd [#allocation5], %s31
      %s33 = sshll.u32 [#allocation4], 4
      %s34 = int_to_ptr.vmem [resolvable:$true] %s33
      %39 = dma.hbm_to_vmem [thread:$0]  %s3, 2048, %s34, [#allocation5], 64, 64, 4
    $region17: #{mlp_forward.1} parent=1 // pred_fallthru
      _
    // Predicated region
    $region18: #{mlp_forward.1} parent=1 // pred_check
      _
    $region19: #{mlp_forward.1} parent=1 // pred_check_branch
      %41 = sbr.rel (0) target = $region21
    $region20: #{mlp_forward.1} parent=1 // pred_region
      _
    $region21: #{mlp_forward.1} parent=1 // pred_fallthru
      _
    // Predicated region
    $region22: #{mlp_forward.1} parent=1 // pred_check
      _
    $region23: #{mlp_forward.1} parent=1 // pred_check_branch
      %43 = sbr.rel (0) target = $region25
    $region24: #{mlp_forward.1} parent=1 // pred_region
      %44 = dma.done [#allocation3], 8192
    $region25: #{mlp_forward.1} parent=1 // pred_fallthru
      _
    // Predicated region
    $region26: #{mlp_forward.1} parent=1 // pred_check
      _
    $region27: #{mlp_forward.1} parent=1 // pred_check_branch
      %46 = sbr.rel (0) target = $region29
    $region28: #{mlp_forward.1} parent=1 // pred_region
      %47 = dma.done [#allocation5], 2048
    $region29: #{mlp_forward.1} parent=1 // pred_fallthru
      _
    %v49 = vld [vmem:[%s0] sm:$0xff]
    %v50 = vld [vmem:[%s0 + $0x8] sm:$0xff]
    %v51 = vld [vmem:[%s0 + $0x10] sm:$0xff]
    %v52 = vld [vmem:[%s0 + $0x18] sm:$0xff]
    %v53 = vld [vmem:[%s0 + $0x20] sm:$0xff]
    %v54 = vld [vmem:[%s0 + $0x28] sm:$0xff]
    %v55 = vld [vmem:[%s0 + $0x30] sm:$0xff]
    %v56 = vld [vmem:[%s0 + $0x38] sm:$0xff]
    %v57 = vpack.c.bf16 %v53, %v49
    %v58 = vpack.c.bf16 %v54, %v50
    %v59 = vpack.c.bf16 %v55, %v51
    %v60 = vpack.c.bf16 %v56, %v52
    %v61 = vld [vmem:[#allocation2] sm:$0xff]
    %v62 = vld [vmem:[#allocation2 + $0x8] sm:$0xff]
    %v63 = vld [vmem:[#allocation2 + $0x10] sm:$0xff]
    %v64 = vld [vmem:[#allocation2 + $0x18] sm:$0xff]
    %v65 = vld [vmem:[#allocation2 + $0x20] sm:$0xff]
    %v66 = vld [vmem:[#allocation2 + $0x28] sm:$0xff]
    %v67 = vld [vmem:[#allocation2 + $0x30] sm:$0xff]
    %v68 = vld [vmem:[#allocation2 + $0x38] sm:$0xff]
    %v69 = vld [vmem:[#allocation2 + $0x40] sm:$0xff]
    %v70 = vld [vmem:[#allocation2 + $0x48] sm:$0xff]
    %v71 = vld [vmem:[#allocation2 + $0x50] sm:$0xff]
    %v72 = vld [vmem:[#allocation2 + $0x58] sm:$0xff]
    %v73 = vld [vmem:[#allocation2 + $0x60] sm:$0xff]
    %v74 = vld [vmem:[#allocation2 + $0x68] sm:$0xff]
    %v75 = vld [vmem:[#allocation2 + $0x70] sm:$0xff]
    %v76 = vld [vmem:[#allocation2 + $0x78] sm:$0xff]
    %v77 = vld [vmem:[#allocation2 + $0x80] sm:$0xff]
    %v78 = vld [vmem:[#allocation2 + $0x88] sm:$0xff]
    %v79 = vld [vmem:[#allocation2 + $0x90] sm:$0xff]
    %v80 = vld [vmem:[#allocation2 + $0x98] sm:$0xff]
    %v81 = vld [vmem:[#allocation2 + $0xa0] sm:$0xff]
    %v82 = vld [vmem:[#allocation2 + $0xa8] sm:$0xff]
    %v83 = vld [vmem:[#allocation2 + $0xb0] sm:$0xff]
    %v84 = vld [vmem:[#allocation2 + $0xb8] sm:$0xff]
    %v85 = vld [vmem:[#allocation2 + $0xc0] sm:$0xff]
    %v86 = vld [vmem:[#allocation2 + $0xc8] sm:$0xff]
    %v87 = vld [vmem:[#allocation2 + $0xd0] sm:$0xff]
    %v88 = vld [vmem:[#allocation2 + $0xd8] sm:$0xff]
    %v89 = vld [vmem:[#allocation2 + $0xe0] sm:$0xff]
    %v90 = vld [vmem:[#allocation2 + $0xe8] sm:$0xff]
    %v91 = vld [vmem:[#allocation2 + $0xf0] sm:$0xff]
    %v92 = vld [vmem:[#allocation2 + $0xf8] sm:$0xff]
    %v93 = vld [vmem:[#allocation2 + $0x100] sm:$0xff]
    %v94 = vld [vmem:[#allocation2 + $0x108] sm:$0xff]
    %v95 = vld [vmem:[#allocation2 + $0x110] sm:$0xff]
    %v96 = vld [vmem:[#allocation2 + $0x118] sm:$0xff]
    %v97 = vld [vmem:[#allocation2 + $0x120] sm:$0xff]
    %v98 = vld [vmem:[#allocation2 + $0x128] sm:$0xff]
    %v99 = vld [vmem:[#allocation2 + $0x130] sm:$0xff]
    %v100 = vld [vmem:[#allocation2 + $0x138] sm:$0xff]
    %v101 = vld [vmem:[#allocation2 + $0x140] sm:$0xff]
    %v102 = vld [vmem:[#allocation2 + $0x148] sm:$0xff]
    %v103 = vld [vmem:[#allocation2 + $0x150] sm:$0xff]
    %v104 = vld [vmem:[#allocation2 + $0x158] sm:$0xff]
    %v105 = vld [vmem:[#allocation2 + $0x160] sm:$0xff]
    %v106 = vld [vmem:[#allocation2 + $0x168] sm:$0xff]
    %v107 = vld [vmem:[#allocation2 + $0x170] sm:$0xff]
    %v108 = vld [vmem:[#allocation2 + $0x178] sm:$0xff]
    %v109 = vld [vmem:[#allocation2 + $0x180] sm:$0xff]
    %v110 = vld [vmem:[#allocation2 + $0x188] sm:$0xff]
    %v111 = vld [vmem:[#allocation2 + $0x190] sm:$0xff]
    %v112 = vld [vmem:[#allocation2 + $0x198] sm:$0xff]
    %v113 = vld [vmem:[#allocation2 + $0x1a0] sm:$0xff]
    %v114 = vld [vmem:[#allocation2 + $0x1a8] sm:$0xff]
    %v115 = vld [vmem:[#allocation2 + $0x1b0] sm:$0xff]
    %v116 = vld [vmem:[#allocation2 + $0x1b8] sm:$0xff]
    %v117 = vld [vmem:[#allocation2 + $0x1c0] sm:$0xff]
    %v118 = vld [vmem:[#allocation2 + $0x1c8] sm:$0xff]
    %v119 = vld [vmem:[#allocation2 + $0x1d0] sm:$0xff]
    %v120 = vld [vmem:[#allocation2 + $0x1d8] sm:$0xff]
    %v121 = vld [vmem:[#allocation2 + $0x1e0] sm:$0xff]
    %v122 = vld [vmem:[#allocation2 + $0x1e8] sm:$0xff]
    %v123 = vld [vmem:[#allocation2 + $0x1f0] sm:$0xff]
    %v124 = vld [vmem:[#allocation2 + $0x1f8] sm:$0xff]
    %v125 = vld [vmem:[%s2] sm:$0x3]
    %v127 = vlaneseq
    %v128 = vshrl.u32 %v127, 7
    %v129 = vsub.s32 0, %v128
    %v130 = vrot.slane %v125, %v129
    %v131 = vlaneseq
    %v132 = vshrl.u32 %v131, 7
    %v133 = vsub.s32 1, %v132
    %v134 = vrot.slane %v125, %v133
    %v201 = vunpack.c.l.b16 %v61
    %v202 = vunpack.c.h.b16 %v61
    %v203 = vunpack.c.l.b16 %v62
    %v204 = vunpack.c.h.b16 %v62
    %v205 = vunpack.c.l.b16 %v63
    %v206 = vunpack.c.h.b16 %v63
    %v207 = vunpack.c.l.b16 %v64
    %v208 = vunpack.c.h.b16 %v64
    %v209 = vunpack.c.l.b16 %v65
    %v210 = vunpack.c.h.b16 %v65
    %v211 = vunpack.c.l.b16 %v66
    %v212 = vunpack.c.h.b16 %v66
    %v213 = vunpack.c.l.b16 %v67
    %v214 = vunpack.c.h.b16 %v67
    %v215 = vunpack.c.l.b16 %v68
    %v216 = vunpack.c.h.b16 %v68
    %v217 = vunpack.c.l.b16 %v69
    %v218 = vunpack.c.h.b16 %v69
    %v219 = vunpack.c.l.b16 %v70
    %v220 = vunpack.c.h.b16 %v70
    %v221 = vunpack.c.l.b16 %v71
    %v222 = vunpack.c.h.b16 %v71
    %v223 = vunpack.c.l.b16 %v72
    %v224 = vunpack.c.h.b16 %v72
    %v225 = vunpack.c.l.b16 %v73
    %v226 = vunpack.c.h.b16 %v73
    %v227 = vunpack.c.l.b16 %v74
    %v228 = vunpack.c.h.b16 %v74
    %v229 = vunpack.c.l.b16 %v75
    %v230 = vunpack.c.h.b16 %v75
    %v231 = vunpack.c.l.b16 %v76
    %v232 = vunpack.c.h.b16 %v76
    %v233 = vunpack.c.l.b16 %v77
    %v234 = vunpack.c.h.b16 %v77
    %v235 = vunpack.c.l.b16 %v78
    %v236 = vunpack.c.h.b16 %v78
    %v237 = vunpack.c.l.b16 %v79
    %v238 = vunpack.c.h.b16 %v79
    %v239 = vunpack.c.l.b16 %v80
    %v240 = vunpack.c.h.b16 %v80
    %v241 = vunpack.c.l.b16 %v81
    %v242 = vunpack.c.h.b16 %v81
    %v243 = vunpack.c.l.b16 %v82
    %v244 = vunpack.c.h.b16 %v82
    %v245 = vunpack.c.l.b16 %v83
    %v246 = vunpack.c.h.b16 %v83
    %v247 = vunpack.c.l.b16 %v84
    %v248 = vunpack.c.h.b16 %v84
    %v249 = vunpack.c.l.b16 %v85
    %v250 = vunpack.c.h.b16 %v85
    %v251 = vunpack.c.l.b16 %v86
    %v252 = vunpack.c.h.b16 %v86
    %v253 = vunpack.c.l.b16 %v87
    %v254 = vunpack.c.h.b16 %v87
    %v255 = vunpack.c.l.b16 %v88
    %v256 = vunpack.c.h.b16 %v88
    %v257 = vunpack.c.l.b16 %v89
    %v258 = vunpack.c.h.b16 %v89
    %v259 = vunpack.c.l.b16 %v90
    %v260 = vunpack.c.h.b16 %v90
    %v261 = vunpack.c.l.b16 %v91
    %v262 = vunpack.c.h.b16 %v91
    %v263 = vunpack.c.l.b16 %v92
    %v264 = vunpack.c.h.b16 %v92
    %v265 = vunpack.c.l.b16 %v93
    %v266 = vunpack.c.h.b16 %v93
    %v267 = vunpack.c.l.b16 %v94
    %v268 = vunpack.c.h.b16 %v94
    %v269 = vunpack.c.l.b16 %v95
    %v270 = vunpack.c.h.b16 %v95
    %v271 = vunpack.c.l.b16 %v96
    %v272 = vunpack.c.h.b16 %v96
    %v273 = vunpack.c.l.b16 %v97
    %v274 = vunpack.c.h.b16 %v97
    %v275 = vunpack.c.l.b16 %v98
    %v276 = vunpack.c.h.b16 %v98
    %v277 = vunpack.c.l.b16 %v99
    %v278 = vunpack.c.h.b16 %v99
    %v279 = vunpack.c.l.b16 %v100
    %v280 = vunpack.c.h.b16 %v100
    %v281 = vunpack.c.l.b16 %v101
    %v282 = vunpack.c.h.b16 %v101
    %v283 = vunpack.c.l.b16 %v102
    %v284 = vunpack.c.h.b16 %v102
    %v285 = vunpack.c.l.b16 %v103
    %v286 = vunpack.c.h.b16 %v103
    %v287 = vunpack.c.l.b16 %v104
    %v288 = vunpack.c.h.b16 %v104
    %v289 = vunpack.c.l.b16 %v105
    %v290 = vunpack.c.h.b16 %v105
    %v291 = vunpack.c.l.b16 %v106
    %v292 = vunpack.c.h.b16 %v106
    %v293 = vunpack.c.l.b16 %v107
    %v294 = vunpack.c.h.b16 %v107
    %v295 = vunpack.c.l.b16 %v108
    %v296 = vunpack.c.h.b16 %v108
    %v297 = vunpack.c.l.b16 %v109
    %v298 = vunpack.c.h.b16 %v109
    %v299 = vunpack.c.l.b16 %v110
    %v300 = vunpack.c.h.b16 %v110
    %v301 = vunpack.c.l.b16 %v111
    %v302 = vunpack.c.h.b16 %v111
    %v303 = vunpack.c.l.b16 %v112
    %v304 = vunpack.c.h.b16 %v112
    %v305 = vunpack.c.l.b16 %v113
    %v306 = vunpack.c.h.b16 %v113
    %v307 = vunpack.c.l.b16 %v114
    %v308 = vunpack.c.h.b16 %v114
    %v309 = vunpack.c.l.b16 %v115
    %v310 = vunpack.c.h.b16 %v115
    %v311 = vunpack.c.l.b16 %v116
    %v312 = vunpack.c.h.b16 %v116
    %v313 = vunpack.c.l.b16 %v117
    %v314 = vunpack.c.h.b16 %v117
    %v315 = vunpack.c.l.b16 %v118
    %v316 = vunpack.c.h.b16 %v118
    %v317 = vunpack.c.l.b16 %v119
    %v318 = vunpack.c.h.b16 %v119
    %v319 = vunpack.c.l.b16 %v120
    %v320 = vunpack.c.h.b16 %v120
    %v321 = vunpack.c.l.b16 %v121
    %v322 = vunpack.c.h.b16 %v121
    %v323 = vunpack.c.l.b16 %v122
    %v324 = vunpack.c.h.b16 %v122
    %v325 = vunpack.c.l.b16 %v123
    %v326 = vunpack.c.h.b16 %v123
    %v327 = vunpack.c.l.b16 %v124
    %v328 = vunpack.c.h.b16 %v124
    %v329 = vpack.c.b16 %v203, %v201
    %v330 = vpack.c.b16 %v204, %v202
    %v331 = vpack.c.b16 %v207, %v205
    %v332 = vpack.c.b16 %v208, %v206
    %v333 = vpack.c.b16 %v211, %v209
    %v334 = vpack.c.b16 %v212, %v210
    %v335 = vpack.c.b16 %v215, %v213
    %v336 = vpack.c.b16 %v216, %v214
    %v337 = vpack.c.b16 %v219, %v217
    %v338 = vpack.c.b16 %v220, %v218
    %v339 = vpack.c.b16 %v223, %v221
    %v340 = vpack.c.b16 %v224, %v222
    %v341 = vpack.c.b16 %v227, %v225
    %v342 = vpack.c.b16 %v228, %v226
    %v343 = vpack.c.b16 %v231, %v229
    %v344 = vpack.c.b16 %v232, %v230
    %v345 = vpack.c.b16 %v235, %v233
    %v346 = vpack.c.b16 %v236, %v234
    %v347 = vpack.c.b16 %v239, %v237
    %v348 = vpack.c.b16 %v240, %v238
    %v349 = vpack.c.b16 %v243, %v241
    %v350 = vpack.c.b16 %v244, %v242
    %v351 = vpack.c.b16 %v247, %v245
    %v352 = vpack.c.b16 %v248, %v246
    %v353 = vpack.c.b16 %v251, %v249
    %v354 = vpack.c.b16 %v252, %v250
    %v355 = vpack.c.b16 %v255, %v253
    %v356 = vpack.c.b16 %v256, %v254
    %v357 = vpack.c.b16 %v259, %v257
    %v358 = vpack.c.b16 %v260, %v258
    %v359 = vpack.c.b16 %v263, %v261
    %v360 = vpack.c.b16 %v264, %v262
    %v361 = vpack.c.b16 %v267, %v265
    %v362 = vpack.c.b16 %v268, %v266
    %v363 = vpack.c.b16 %v271, %v269
    %v364 = vpack.c.b16 %v272, %v270
    %v365 = vpack.c.b16 %v275, %v273
    %v366 = vpack.c.b16 %v276, %v274
    %v367 = vpack.c.b16 %v279, %v277
    %v368 = vpack.c.b16 %v280, %v278
    %v369 = vpack.c.b16 %v283, %v281
    %v370 = vpack.c.b16 %v284, %v282
    %v371 = vpack.c.b16 %v287, %v285
    %v372 = vpack.c.b16 %v288, %v286
    %v373 = vpack.c.b16 %v291, %v289
    %v374 = vpack.c.b16 %v292, %v290
    %v375 = vpack.c.b16 %v295, %v293
    %v376 = vpack.c.b16 %v296, %v294
    %v377 = vpack.c.b16 %v299, %v297
    %v378 = vpack.c.b16 %v300, %v298
    %v379 = vpack.c.b16 %v303, %v301
    %v380 = vpack.c.b16 %v304, %v302
    %v381 = vpack.c.b16 %v307, %v305
    %v382 = vpack.c.b16 %v308, %v306
    %v383 = vpack.c.b16 %v311, %v309
    %v384 = vpack.c.b16 %v312, %v310
    %v385 = vpack.c.b16 %v315, %v313
    %v386 = vpack.c.b16 %v316, %v314
    %v387 = vpack.c.b16 %v319, %v317
    %v388 = vpack.c.b16 %v320, %v318
    %v389 = vpack.c.b16 %v323, %v321
    %v390 = vpack.c.b16 %v324, %v322
    %v391 = vpack.c.b16 %v327, %v325
    %v392 = vpack.c.b16 %v328, %v326
    %457 = vmatprep.subr.bf16.mxu0 %v344
    %458 = vmatpush1.bf16.msra.mxu0 %v343
    %459 = vmatprep.subr.bf16.mxu0 %v342
    %460 = vmatpush1.bf16.msra.mxu0 %v341
    %461 = vmatprep.subr.bf16.mxu0 %v340
    %462 = vmatpush1.bf16.msra.mxu0 %v339
    %463 = vmatprep.subr.bf16.mxu0 %v338
    %464 = vmatpush1.bf16.msra.mxu0 %v337
    %465 = vmatprep.subr.bf16.mxu0 %v336
    %466 = vmatpush1.bf16.msra.mxu0 %v335
    %467 = vmatprep.subr.bf16.mxu0 %v334
    %468 = vmatpush1.bf16.msra.mxu0 %v333
    %469 = vmatprep.subr.bf16.mxu0 %v332
    %470 = vmatpush1.bf16.msra.mxu0 %v331
    %471 = vmatprep.subr.bf16.mxu0 %v330
    %472 = vmatpush1.bf16.msra.mxu0 %v329
    %473 = vmatprep.subr.bf16.mxu0 %v360
    %474 = vmatpush2.bf16.msra.mxu0 %v359
    %475 = vmatprep.subr.bf16.mxu0 %v358
    %476 = vmatpush2.bf16.msra.mxu0 %v357
    %477 = vmatprep.subr.bf16.mxu0 %v356
    %478 = vmatpush2.bf16.msra.mxu0 %v355
    %479 = vmatprep.subr.bf16.mxu0 %v354
    %480 = vmatpush2.bf16.msra.mxu0 %v353
    %481 = vmatprep.subr.bf16.mxu0 %v352
    %482 = vmatpush2.bf16.msra.mxu0 %v351
    %483 = vmatprep.subr.bf16.mxu0 %v350
    %484 = vmatpush2.bf16.msra.mxu0 %v349
    %485 = vmatprep.subr.bf16.mxu0 %v348
    %486 = vmatpush2.bf16.msra.mxu0 %v347
    %487 = vmatprep.subr.bf16.mxu0 %v346
    %488 = vmatpush2.bf16.msra.mxu0 %v345
    %489 = vmatprep.mubr.bf16.mxu0 %v58
    %490 = vmatmul.mubr.bf16.gmra.mxu0 %v57
    %v491 = vpop.f32.mrf.mxu0
    %v492 = vadd.f32 %v130, %v491
    %v493 = vpop.f32.mrf.mxu0
    %v494 = vadd.f32 %v134, %v493
    %v495 = vpop.f32.mrf.mxu0
    %v496 = vadd.f32 %v130, %v495
    %v497 = vpop.f32.mrf.mxu0
    %v498 = vadd.f32 %v134, %v497
    %499 = vdwg.mxu0
    %500 = vmatprep.subr.bf16.mxu0 %v376
    %501 = vmatpush1.bf16.msra.mxu0 %v375
    %502 = vmatprep.subr.bf16.mxu0 %v374
    %503 = vmatpush1.bf16.msra.mxu0 %v373
    %504 = vmatprep.subr.bf16.mxu0 %v372
    %505 = vmatpush1.bf16.msra.mxu0 %v371
    %506 = vmatprep.subr.bf16.mxu0 %v370
    %507 = vmatpush1.bf16.msra.mxu0 %v369
    %508 = vmatprep.subr.bf16.mxu0 %v368
    %509 = vmatpush1.bf16.msra.mxu0 %v367
    %510 = vmatprep.subr.bf16.mxu0 %v366
    %511 = vmatpush1.bf16.msra.mxu0 %v365
    %512 = vmatprep.subr.bf16.mxu0 %v364
    %513 = vmatpush1.bf16.msra.mxu0 %v363
    %514 = vmatprep.subr.bf16.mxu0 %v362
    %515 = vmatpush1.bf16.msra.mxu0 %v361
    %516 = vmatprep.subr.bf16.mxu0 %v392
    %517 = vmatpush2.bf16.msra.mxu0 %v391
    %518 = vmatprep.subr.bf16.mxu0 %v390
    %519 = vmatpush2.bf16.msra.mxu0 %v389
    %520 = vmatprep.subr.bf16.mxu0 %v388
    %521 = vmatpush2.bf16.msra.mxu0 %v387
    %522 = vmatprep.subr.bf16.mxu0 %v386
    %523 = vmatpush2.bf16.msra.mxu0 %v385
    %524 = vmatprep.subr.bf16.mxu0 %v384
    %525 = vmatpush2.bf16.msra.mxu0 %v383
    %526 = vmatprep.subr.bf16.mxu0 %v382
    %527 = vmatpush2.bf16.msra.mxu0 %v381
    %528 = vmatprep.subr.bf16.mxu0 %v380
    %529 = vmatpush2.bf16.msra.mxu0 %v379
    %530 = vmatprep.subr.bf16.mxu0 %v378
    %531 = vmatpush2.bf16.msra.mxu0 %v377
    %532 = vmatprep.mubr.bf16.mxu0 %v60
    %533 = vmatmul.mubr.bf16.gmra.mxu0 %v59
    %v534 = vpop.f32.mrf.mxu0
    %v535 = vadd.f32 %v492, %v534
    %v536 = vpop.f32.mrf.mxu0
    %v537 = vadd.f32 %v494, %v536
    %v538 = vpop.f32.mrf.mxu0
    %v539 = vadd.f32 %v496, %v538
    %v540 = vpop.f32.mrf.mxu0
    %v541 = vadd.f32 %v498, %v540
    %542 = vdwg.mxu0
    %v543 = vmax.f32 %v535, 0.0
    %v544 = vmax.f32 %v537, 0.0
    %v545 = vmax.f32 %v539, 0.0
    %v546 = vmax.f32 %v541, 0.0
    %v547 = vpack.c.bf16 %v545, %v543
    %v548 = vpack.c.bf16 %v546, %v544
    %v549 = vld [vmem:[#allocation4] sm:$0xf]
    %v550 = vld [vmem:[#allocation4 + $0x4] sm:$0xf]
    %v551 = vld [vmem:[#allocation4 + $0x8] sm:$0xf]
    %v552 = vld [vmem:[#allocation4 + $0xc] sm:$0xf]
    %v553 = vld [vmem:[#allocation4 + $0x10] sm:$0xf]
    %v554 = vld [vmem:[#allocation4 + $0x14] sm:$0xf]
    %v555 = vld [vmem:[#allocation4 + $0x18] sm:$0xf]
    %v556 = vld [vmem:[#allocation4 + $0x1c] sm:$0xf]
    %v557 = vld [vmem:[#allocation4 + $0x20] sm:$0xf]
    %v558 = vld [vmem:[#allocation4 + $0x24] sm:$0xf]
    %v559 = vld [vmem:[#allocation4 + $0x28] sm:$0xf]
    %v560 = vld [vmem:[#allocation4 + $0x2c] sm:$0xf]
    %v561 = vld [vmem:[#allocation4 + $0x30] sm:$0xf]
    %v562 = vld [vmem:[#allocation4 + $0x34] sm:$0xf]
    %v563 = vld [vmem:[#allocation4 + $0x38] sm:$0xf]
    %v564 = vld [vmem:[#allocation4 + $0x3c] sm:$0xf]
    %v565 = vld [vmem:[#allocation4 + $0x40] sm:$0xf]
    %v566 = vld [vmem:[#allocation4 + $0x44] sm:$0xf]
    %v567 = vld [vmem:[#allocation4 + $0x48] sm:$0xf]
    %v568 = vld [vmem:[#allocation4 + $0x4c] sm:$0xf]
    %v569 = vld [vmem:[#allocation4 + $0x50] sm:$0xf]
    %v570 = vld [vmem:[#allocation4 + $0x54] sm:$0xf]
    %v571 = vld [vmem:[#allocation4 + $0x58] sm:$0xf]
    %v572 = vld [vmem:[#allocation4 + $0x5c] sm:$0xf]
    %v573 = vld [vmem:[#allocation4 + $0x60] sm:$0xf]
    %v574 = vld [vmem:[#allocation4 + $0x64] sm:$0xf]
    %v575 = vld [vmem:[#allocation4 + $0x68] sm:$0xf]
    %v576 = vld [vmem:[#allocation4 + $0x6c] sm:$0xf]
    %v577 = vld [vmem:[#allocation4 + $0x70] sm:$0xf]
    %v578 = vld [vmem:[#allocation4 + $0x74] sm:$0xf]
    %v579 = vld [vmem:[#allocation4 + $0x78] sm:$0xf]
    %v580 = vld [vmem:[#allocation4 + $0x7c] sm:$0xf]
    %v581 = vld [vmem:[%s4] sm:$0x1]
    %v583 = vlaneseq
    %v584 = vshrl.u32 %v583, 7
    %v585 = vsub.s32 0, %v584
    %v586 = vrot.slane %v581, %v585
    %v620 = vunpack.c.l.b16 %v549
    %v621 = vunpack.c.l.b16 %v550
    %v622 = vunpack.c.l.b16 %v551
    %v623 = vunpack.c.l.b16 %v552
    %v624 = vunpack.c.l.b16 %v553
    %v625 = vunpack.c.l.b16 %v554
    %v626 = vunpack.c.l.b16 %v555
    %v627 = vunpack.c.l.b16 %v556
    %v628 = vunpack.c.l.b16 %v557
    %v629 = vunpack.c.l.b16 %v558
    %v630 = vunpack.c.l.b16 %v559
    %v631 = vunpack.c.l.b16 %v560
    %v632 = vunpack.c.l.b16 %v561
    %v633 = vunpack.c.l.b16 %v562
    %v634 = vunpack.c.l.b16 %v563
    %v635 = vunpack.c.l.b16 %v564
    %v636 = vunpack.c.l.b16 %v565
    %v637 = vunpack.c.l.b16 %v566
    %v638 = vunpack.c.l.b16 %v567
    %v639 = vunpack.c.l.b16 %v568
    %v640 = vunpack.c.l.b16 %v569
    %v641 = vunpack.c.l.b16 %v570
    %v642 = vunpack.c.l.b16 %v571
    %v643 = vunpack.c.l.b16 %v572
    %v644 = vunpack.c.l.b16 %v573
    %v645 = vunpack.c.l.b16 %v574
    %v646 = vunpack.c.l.b16 %v575
    %v647 = vunpack.c.l.b16 %v576
    %v648 = vunpack.c.l.b16 %v577
    %v649 = vunpack.c.l.b16 %v578
    %v650 = vunpack.c.l.b16 %v579
    %v651 = vunpack.c.l.b16 %v580
    %v652 = vpack.c.b16 %v621, %v620
    %v653 = vpack.c.b16 %v623, %v622
    %v654 = vpack.c.b16 %v625, %v624
    %v655 = vpack.c.b16 %v627, %v626
    %v656 = vpack.c.b16 %v629, %v628
    %v657 = vpack.c.b16 %v631, %v630
    %v658 = vpack.c.b16 %v633, %v632
    %v659 = vpack.c.b16 %v635, %v634
    %v660 = vpack.c.b16 %v637, %v636
    %v661 = vpack.c.b16 %v639, %v638
    %v662 = vpack.c.b16 %v641, %v640
    %v663 = vpack.c.b16 %v643, %v642
    %v664 = vpack.c.b16 %v645, %v644
    %v665 = vpack.c.b16 %v647, %v646
    %v666 = vpack.c.b16 %v649, %v648
    %v667 = vpack.c.b16 %v651, %v650
    %684 = vmatprep.subr.bf16.mxu0 0
    %685 = vmatpush1.bf16.msra.mxu0 %v659
    %686 = vmatprep.subr.bf16.mxu0 0
    %687 = vmatpush1.bf16.msra.mxu0 %v658
    %688 = vmatprep.subr.bf16.mxu0 0
    %689 = vmatpush1.bf16.msra.mxu0 %v657
    %690 = vmatprep.subr.bf16.mxu0 0
    %691 = vmatpush1.bf16.msra.mxu0 %v656
    %692 = vmatprep.subr.bf16.mxu0 0
    %693 = vmatpush1.bf16.msra.mxu0 %v655
    %694 = vmatprep.subr.bf16.mxu0 0
    %695 = vmatpush1.bf16.msra.mxu0 %v654
    %696 = vmatprep.subr.bf16.mxu0 0
    %697 = vmatpush1.bf16.msra.mxu0 %v653
    %698 = vmatprep.subr.bf16.mxu0 0
    %699 = vmatpush1.bf16.msra.mxu0 %v652
    %700 = vmatprep.subr.bf16.mxu0 0
    %701 = vmatpush2.bf16.msra.mxu0 %v667
    %702 = vmatprep.subr.bf16.mxu0 0
    %703 = vmatpush2.bf16.msra.mxu0 %v666
    %704 = vmatprep.subr.bf16.mxu0 0
    %705 = vmatpush2.bf16.msra.mxu0 %v665
    %706 = vmatprep.subr.bf16.mxu0 0
    %707 = vmatpush2.bf16.msra.mxu0 %v664
    %708 = vmatprep.subr.bf16.mxu0 0
    %709 = vmatpush2.bf16.msra.mxu0 %v663
    %710 = vmatprep.subr.bf16.mxu0 0
    %711 = vmatpush2.bf16.msra.mxu0 %v662
    %712 = vmatprep.subr.bf16.mxu0 0
    %713 = vmatpush2.bf16.msra.mxu0 %v661
    %714 = vmatprep.subr.bf16.mxu0 0
    %715 = vmatpush2.bf16.msra.mxu0 %v660
    %716 = vmatprep.mubr.bf16.mxu0 %v548
    %717 = vmatmul.mubr.bf16.gmra.mxu0 %v547
    %v718 = vpop.f32.mrf.mxu0
    %v719 = vadd.f32 %v586, %v718
    %v720 = vpop.f32.mrf.mxu0
    %v721 = vpop.f32.mrf.mxu0
    %v722 = vadd.f32 %v586, %v721
    %v723 = vpop.f32.mrf.mxu0
    %724 = vdwg.mxu0
    %v725 = vpack.c.bf16 %v722, %v719
    %v727 = vunpack.c.l.b16 %v725
    %v728 = vunpack.c.h.b16 %v725
    %v729 = vpack.c.b16 %v727, %v727
    %v730 = vpack.c.b16 %v728, %v728
    %733 = vst [vmem:[%s5] sm:$0xf] %v729
    %734 = vst [vmem:[%s5 + $0x4] sm:$0xf] %v730
    // Predicated region
    $region30: #{mlp_forward.1} parent=1 // pred_check
      _
    $region31: #{mlp_forward.1} parent=1 // pred_check_branch
      %736 = sbr.rel (0) target = $region33
    $region32: #{mlp_forward.1} parent=1 // pred_region
      _
    $region33: #{mlp_forward.1} parent=1 // pred_fallthru
      _
    // Predicated region
    $region34: #{mlp_forward.1} parent=1 // pred_check
      _
    $region35: #{mlp_forward.1} parent=1 // pred_check_branch
      %738 = sbr.rel (0) target = $region37
    $region36: #{mlp_forward.1} parent=1 // pred_region
      _
    $region37: #{mlp_forward.1} parent=1 // pred_fallthru
      _
    %739 = vsyncpa [#allocation3], 1
    %740 = vsyncpa [#allocation5], 1

</llo_original>
